<compile_context>
chip_gen: v6e
topology: v6e:2x2x1
jax: 0.10.0
libtpu: 0.0.40
codegen_flags: <defaults>
</compile_context>

<pallas_src>
import functools

import jax
import jax.numpy as jnp
from jax import lax
from jax.experimental import pallas as pl
from jax.experimental.pallas import tpu as pltpu


def _round_up(x, m):
    return (x + m - 1) // m * m


def _vmem_footprint_bytes(t_chunk, bp, f, hp, x_bytes, w_bytes, out_bytes):
    """Approximate VMEM footprint of one pipelined chunk."""
    # Streamed operands (x chunk in, out chunk back) are double-buffered.
    streamed = 2 * t_chunk * bp * (f * x_bytes + hp * out_bytes)
    # Stationary whole-array VMEM residents: W_ih^T, W_hh^T (compute dtype),
    # h0 (f32), bias (1,Hp) padded to 8 sublanes.
    stationary = (f * hp + hp * hp) * w_bytes + (bp + 8) * hp * 4
    # Scratch: carried hidden state + staged input projection (both f32).
    scratch = (bp + t_chunk * bp) * hp * 4
    return streamed + stationary + scratch


def _elman_rnn_chunk_kernel(x_ref, h0_ref, w_ih_ref, w_hh_ref, b_ref,
                            out_ref, h_scratch, xw_scratch, *, t_chunk, bp):
    """One grid step == one chunk of `t_chunk` RNN time steps.

    x_ref     : (t_chunk*bp, F)   input slab for this chunk (compute dtype)
    h0_ref    : (bp, Hp)          initial hidden state (f32), VMEM-resident
    w_ih_ref  : (F, Hp)           W_ih^T (compute dtype), VMEM-resident
    w_hh_ref  : (Hp, Hp)          W_hh^T (compute dtype), VMEM-resident
    b_ref     : (1, Hp)           b_ih + b_hh (f32), VMEM-resident
    out_ref   : (t_chunk*bp, Hp)  hidden states for this chunk (caller dtype)
    h_scratch : VMEM (bp, Hp) f32          recurrent state carried over chunks
    xw_scratch: VMEM (t_chunk*bp, Hp) f32  staged input projection
    """
    c = pl.program_id(0)

    @pl.when(c == 0)
    def _():
        h_scratch[...] = h0_ref[...].astype(jnp.float32)

    # Hoisted input projection + bias for the whole chunk: one big MXU matmul
    # completely off the serial dependency chain, staged through VMEM so it
    # never lives as a huge vreg value at large t_chunk.
    xw_scratch[...] = (
        jnp.dot(x_ref[...], w_ih_ref[...], preferred_element_type=jnp.float32)
        + b_ref[...])

    def step(t, h):
        row = pl.multiple_of(t * bp, bp)          # sublane-aligned offset
        # Only h @ W_hh^T (+ add + tanh) sits on the serial chain.  W_hh is
        # read from its VMEM ref here instead of being hoisted into a value,
        # keeping vreg pressure bounded for large Hp.
        rec = jnp.dot(h.astype(w_hh_ref.dtype), w_hh_ref[...],
                      preferred_element_type=jnp.float32)
        h_new = jnp.tanh(xw_scratch[pl.ds(row, bp), :] + rec)  # f32 VPU/EUP
        out_ref[pl.ds(row, bp), :] = h_new.astype(out_ref.dtype)
        return h_new

    # Note: trailing padded timesteps (x == 0) keep advancing h, which is
    # harmless because the padded output rows are sliced off in the wrapper
    # and the final state is not exposed by this module's API.
    h_final = lax.fori_loop(0, t_chunk, step, h_scratch[...],
                            unroll=min(8, t_chunk))
    h_scratch[...] = h_final


def elman_rnn_forward(x_in, params, *, batch_first=False, initial_hidden=None,
                      t_chunk=64, compute_dtype=jnp.bfloat16,
                      vmem_budget_bytes=24 << 20):
    """Pallas equivalent of ElmanRNN.forward.

    x_in: (B, T, F) if batch_first else (T, B, F).
    params: dict with W_ih (H, F), W_hh (H, H), b_ih (H,), b_hh (H,).
    compute_dtype: dtype fed to the MXU (bf16 default); state/tanh stay f32.
    Returns hiddens with the same axis convention and dtype as the input.
    """
    if batch_first:
        x_tm = jnp.transpose(x_in, (1, 0, 2))   # -> (T, B, F)
    else:
        x_tm = x_in
    T, B, F = x_tm.shape
    H = params["W_hh"].shape[0]
    out_dtype = x_in.dtype

    if initial_hidden is None:
        initial_hidden = jnp.zeros((B, H), dtype=jnp.float32)

    # Padded sizes: lane-dense H (x128), sublane-aligned B (x8).
    Bp = _round_up(B, 8)
    Hp = _round_up(H, 128)

    x_bytes = jnp.dtype(compute_dtype).itemsize
    w_bytes = x_bytes
    out_bytes = jnp.dtype(out_dtype).itemsize

    # Pick the largest chunk (<= request, <= T) that fits the VMEM budget.
    tc = max(1, min(int(t_chunk), T))
    while tc > 1 and _vmem_footprint_bytes(
            tc, Bp, F, Hp, x_bytes, w_bytes, out_bytes) > vmem_budget_bytes:
        tc = max(1, tc // 2)

    Tp = _round_up(T, tc)
    n_chunks = Tp // tc

    # Zero-pad directly in the target dtypes (no f32 staging copy of x).
    # Padded H columns / padded W rows are exact zeros, so the real lanes of
    # the recurrence are numerically untouched; padded batch rows and padded
    # trailing timesteps are sliced off below.
    x_pad = jnp.zeros((Tp, Bp, F), compute_dtype).at[:T, :B, :].set(
        x_tm.astype(compute_dtype))
    x_2d = x_pad.reshape(Tp * Bp, F)

    h0 = jnp.zeros((Bp, Hp), jnp.float32).at[:B, :H].set(
        initial_hidden.astype(jnp.float32))

    w_ih_t = jnp.zeros((F, Hp), compute_dtype).at[:, :H].set(
        jnp.transpose(params["W_ih"]).astype(compute_dtype))
    w_hh_t = jnp.zeros((Hp, Hp), compute_dtype).at[:H, :H].set(
        jnp.transpose(params["W_hh"]).astype(compute_dtype))
    bias = jnp.zeros((1, Hp), jnp.float32).at[0, :H].set(
        (params["b_ih"] + params["b_hh"]).astype(jnp.float32))

    footprint = _vmem_footprint_bytes(tc, Bp, F, Hp,
                                      x_bytes, w_bytes, out_bytes)
    vmem_limit = int(min(max(2 * footprint + (2 << 20), 16 << 20), 56 << 20))

    kernel = functools.partial(_elman_rnn_chunk_kernel, t_chunk=tc, bp=Bp)

    grid_spec = pltpu.PrefetchScalarGridSpec(
        num_scalar_prefetch=0,
        grid=(n_chunks,),
        in_specs=[
            # Streamed, double-buffered x chunk slab.
            pl.BlockSpec((tc * Bp, F), lambda c: (c, 0)),
            # Stationary operands: whole-array VMEM residents (single copy,
            # no per-chunk DMA, no double-buffering of the weights).
            pl.BlockSpec(memory_space=pltpu.MemorySpace.VMEM),   # h0
            pl.BlockSpec(memory_space=pltpu.MemorySpace.VMEM),   # W_ih^T
            pl.BlockSpec(memory_space=pltpu.MemorySpace.VMEM),   # W_hh^T
            pl.BlockSpec(memory_space=pltpu.MemorySpace.VMEM),   # bias
        ],
        out_specs=pl.BlockSpec((tc * Bp, Hp), lambda c: (c, 0)),
        scratch_shapes=[
            pltpu.VMEM((Bp, Hp), jnp.float32),        # carried hidden state
            pltpu.VMEM((tc * Bp, Hp), jnp.float32),   # staged x@W_ih^T + b
        ],
    )

    out_2d = pl.pallas_call(
        kernel,
        out_shape=jax.ShapeDtypeStruct((Tp * Bp, Hp), out_dtype),
        grid_spec=grid_spec,
        compiler_params=pltpu.CompilerParams(
            # time axis is a true recurrence -> must stay sequential
            dimension_semantics=("arbitrary",),
            vmem_limit_bytes=vmem_limit,
        ),
    )(x_2d, h0, w_ih_t, w_hh_t, bias)

    hiddens_tm = out_2d.reshape(Tp, Bp, Hp)[:T, :B, :H]
    if batch_first:
        return jnp.transpose(hiddens_tm, (1, 0, 2))   # -> (B, T, H)
    return hiddens_tm


def init_elman_params(key, input_size, hidden_size):
    """Deterministic init mirroring nn.RNNCell's U(-1/sqrt(H), 1/sqrt(H))."""
    k1, k2, k3, k4 = jax.random.split(key, 4)
    bound = 1.0 / jnp.sqrt(hidden_size)
    return {
        "W_ih": jax.random.uniform(k1, (hidden_size, input_size),
                                   jnp.float32, -bound, bound),
        "W_hh": jax.random.uniform(k2, (hidden_size, hidden_size),
                                   jnp.float32, -bound, bound),
        "b_ih": jax.random.uniform(k3, (hidden_size,),
                                   jnp.float32, -bound, bound),
        "b_hh": jax.random.uniform(k4, (hidden_size,),
                                   jnp.float32, -bound, bound),
    }


def _reference_forward(x_in, params, *, batch_first=False):
    """Pure-JAX reference (same math) for the correctness check."""
    x_tm = jnp.transpose(x_in, (1, 0, 2)) if batch_first else x_in
    h = jnp.zeros((x_tm.shape[1], params["W_hh"].shape[0]), jnp.float32)

    def step(h, x_t):
        h_new = jnp.tanh(x_t @ params["W_ih"].T + params["b_ih"]
                         + h @ params["W_hh"].T + params["b_hh"])
        return h_new, h_new

    _, hs = jax.lax.scan(step, h, x_tm)
    return jnp.transpose(hs, (1, 0, 2)) if batch_first else hs


if __name__ == "__main__":
    key = jax.random.PRNGKey(0)
    k_param, k_x, k_x2 = jax.random.split(key, 3)

    batch = 2
    seq = 8
    input_size = 16
    hidden_size = 32
    batch_first = True

    params = init_elman_params(k_param, input_size, hidden_size)
    x = jax.random.normal(k_x, (batch, seq, input_size), jnp.float32)
    ref = _reference_forward(x, params, batch_first=batch_first)

    # 1) f32 MXU path: tight check against the pure-JAX reference.
    fwd_f32 = jax.jit(functools.partial(
        elman_rnn_forward, batch_first=batch_first,
        compute_dtype=jnp.float32))
    out_f32 = fwd_f32(x, params)
    jax.block_until_ready(out_f32)
    assert out_f32.shape == (batch, seq, hidden_size)
    assert jnp.allclose(out_f32, ref, atol=1e-5, rtol=1e-5), "f32 mismatch"

    # 2) bf16 MXU-input path (state/bias/tanh stay f32): looser tolerance.
    fwd_bf16 = jax.jit(functools.partial(
        elman_rnn_forward, batch_first=batch_first,
        compute_dtype=jnp.bfloat16))
    out_bf16 = fwd_bf16(x, params)
    jax.block_until_ready(out_bf16)
    assert out_bf16.shape == (batch, seq, hidden_size)
    assert jnp.allclose(out_bf16, ref, atol=5e-2, rtol=5e-2), "bf16 mismatch"

    # 3) T not a multiple of t_chunk (exercises trailing-timestep padding).
    seq2 = 10
    x2 = jax.random.normal(k_x2, (batch, seq2, input_size), jnp.float32)
    ref2 = _reference_forward(x2, params, batch_first=batch_first)
    fwd_pad = jax.jit(functools.partial(
        elman_rnn_forward, batch_first=batch_first, t_chunk=4,
        compute_dtype=jnp.float32))
    out_pad = fwd_pad(x2, params)
    jax.block_until_ready(out_pad)
    assert out_pad.shape == (batch, seq2, hidden_size)
    assert jnp.allclose(out_pad, ref2, atol=1e-5, rtol=1e-5), "padded-T mismatch"

    print("KERNEL_OK")
</pallas_src>

<mosaic_0001>
module attributes {stable_mosaic.version = 11 : i64} {
  func.func @_elman_rnn_chunk_kernel(%arg0: i32, %arg1: memref<64x16xf32, #tpu.memory_space<vmem>>, %arg2: memref<8x128xf32, #tpu.memory_space<vmem>>, %arg3: memref<16x128xf32, #tpu.memory_space<vmem>>, %arg4: memref<128x128xf32, #tpu.memory_space<vmem>>, %arg5: memref<1x128xf32, #tpu.memory_space<vmem>>, %arg6: memref<64x128xf32, #tpu.memory_space<vmem>>, %arg7: memref<8x128xf32, #tpu.memory_space<vmem>>, %arg8: memref<64x128xf32, #tpu.memory_space<vmem>>) attributes {dimension_semantics = [#tpu.dimension_semantics<arbitrary>], iteration_bounds = array<i64: 1>, scalar_prefetch = 0 : i64, scratch_operands = 2 : i64, tpu.core_type = #tpu.core_type<tc>, window_params = [{transform_indices = @transform_0, window_bounds = array<i64: 64, 16>}, {pipeline_mode = #tpu.pipeline_mode<synchronous>, transform_indices = @transform_1, window_bounds = array<i64: 8, 128>}, {pipeline_mode = #tpu.pipeline_mode<synchronous>, transform_indices = @transform_2, window_bounds = array<i64: 16, 128>}, {pipeline_mode = #tpu.pipeline_mode<synchronous>, transform_indices = @transform_3, window_bounds = array<i64: 128, 128>}, {pipeline_mode = #tpu.pipeline_mode<synchronous>, transform_indices = @transform_4, window_bounds = array<i64: 1, 128>}, {transform_indices = @transform_5, window_bounds = array<i64: 64, 128>}]} {
    %c0_i32 = arith.constant 0 : i32
    %0 = arith.cmpi eq, %arg0, %c0_i32 : i32
    %1 = arith.extui %0 : i1 to i32
    %c0_i32_0 = arith.constant 0 : i32
    %2 = arith.cmpi ne, %1, %c0_i32_0 : i32
    scf.if %2 {
      %c0_61 = arith.constant 0 : index
      %c0_62 = arith.constant 0 : index
      %92 = vector.load %arg2[%c0_61, %c0_62] : memref<8x128xf32, #tpu.memory_space<vmem>>, vector<8x128xf32>
      %c0_63 = arith.constant 0 : index
      %c0_64 = arith.constant 0 : index
      %93 = vector.load %arg7[%c0_63, %c0_64] : memref<8x128xf32, #tpu.memory_space<vmem>>, vector<8x128xf32>
      tpu.vector_store %arg7[%c0_63, %c0_64], %92 {strides = array<i32>} : memref<8x128xf32, #tpu.memory_space<vmem>>, vector<8x128xf32>,
    } else {
    }
    %c0 = arith.constant 0 : index
    %c0_1 = arith.constant 0 : index
    %3 = vector.load %arg1[%c0, %c0_1] : memref<64x16xf32, #tpu.memory_space<vmem>>, vector<64x16xf32>
    %c0_2 = arith.constant 0 : index
    %c0_3 = arith.constant 0 : index
    %4 = vector.load %arg3[%c0_2, %c0_3] : memref<16x128xf32, #tpu.memory_space<vmem>>, vector<16x128xf32>
    %cst = arith.constant dense<0.000000e+00> : vector<64x128xf32>
    %5 = tpu.matmul %3, %4, %cst {dimension_numbers = #tpu.dot_dimension_numbers<[1], [0], [0], [1], [0, 0, 1, 1], [], []>} : vector<64x16xf32>, vector<16x128xf32>, vector<64x128xf32> -> vector<64x128xf32>
    %c0_4 = arith.constant 0 : index
    %c0_5 = arith.constant 0 : index
    %6 = vector.load %arg5[%c0_4, %c0_5] : memref<1x128xf32, #tpu.memory_space<vmem>>, vector<1x128xf32>
    %7 = vector.broadcast %6 : vector<1x128xf32> to vector<64x128xf32>
    %8 = arith.addf %5, %7 : vector<64x128xf32>
    %c0_6 = arith.constant 0 : index
    %c0_7 = arith.constant 0 : index
    %9 = vector.load %arg8[%c0_6, %c0_7] : memref<64x128xf32, #tpu.memory_space<vmem>>, vector<64x128xf32>
    tpu.vector_store %arg8[%c0_6, %c0_7], %8 {strides = array<i32>} : memref<64x128xf32, #tpu.memory_space<vmem>>, vector<64x128xf32>,
    %c0_8 = arith.constant 0 : index
    %c0_9 = arith.constant 0 : index
    %10 = vector.load %arg7[%c0_8, %c0_9] : memref<8x128xf32, #tpu.memory_space<vmem>>, vector<8x128xf32>
    %c0_i32_10 = arith.constant 0 : i32
    %c8_i32 = arith.constant 8 : i32
    %11 = arith.muli %c0_i32_10, %c8_i32 : i32
    %12 = tpu.assume_multiple %11, 8 : i32
    %c0_11 = arith.constant 0 : index
    %c0_12 = arith.constant 0 : index
    %13 = vector.load %arg4[%c0_11, %c0_12] : memref<128x128xf32, #tpu.memory_space<vmem>>, vector<128x128xf32>
    %cst_13 = arith.constant dense<0.000000e+00> : vector<8x128xf32>
    %14 = tpu.matmul %10, %13, %cst_13 {dimension_numbers = #tpu.dot_dimension_numbers<[1], [0], [0], [1], [0, 0, 1, 1], [], []>} : vector<8x128xf32>, vector<128x128xf32>, vector<8x128xf32> -> vector<8x128xf32>
    %15 = arith.index_cast %12 : i32 to index
    %c0_14 = arith.constant 0 : index
    %16 = vector.load %arg8[%15, %c0_14] : memref<64x128xf32, #tpu.memory_space<vmem>>, vector<8x128xf32>
    %17 = arith.addf %16, %14 : vector<8x128xf32>
    %18 = math.tanh %17 : vector<8x128xf32>
    %19 = arith.index_cast %12 : i32 to index
    %c0_15 = arith.constant 0 : index
    %20 = vector.load %arg6[%19, %c0_15] : memref<64x128xf32, #tpu.memory_space<vmem>>, vector<8x128xf32>
    tpu.vector_store %arg6[%19, %c0_15], %18 {strides = array<i32>} : memref<64x128xf32, #tpu.memory_space<vmem>>, vector<8x128xf32>,
    %c1_i32 = arith.constant 1 : i32
    %c8_i32_16 = arith.constant 8 : i32
    %21 = arith.muli %c1_i32, %c8_i32_16 : i32
    %22 = tpu.assume_multiple %21, 8 : i32
    %c0_17 = arith.constant 0 : index
    %c0_18 = arith.constant 0 : index
    %23 = vector.load %arg4[%c0_17, %c0_18] : memref<128x128xf32, #tpu.memory_space<vmem>>, vector<128x128xf32>
    %cst_19 = arith.constant dense<0.000000e+00> : vector<8x128xf32>
    %24 = tpu.matmul %18, %23, %cst_19 {dimension_numbers = #tpu.dot_dimension_numbers<[1], [0], [0], [1], [0, 0, 1, 1], [], []>} : vector<8x128xf32>, vector<128x128xf32>, vector<8x128xf32> -> vector<8x128xf32>
    %25 = arith.index_cast %22 : i32 to index
    %c0_20 = arith.constant 0 : index
    %26 = vector.load %arg8[%25, %c0_20] : memref<64x128xf32, #tpu.memory_space<vmem>>, vector<8x128xf32>
    %27 = arith.addf %26, %24 : vector<8x128xf32>
    %28 = math.tanh %27 : vector<8x128xf32>
    %29 = arith.index_cast %22 : i32 to index
    %c0_21 = arith.constant 0 : index
    %30 = vector.load %arg6[%29, %c0_21] : memref<64x128xf32, #tpu.memory_space<vmem>>, vector<8x128xf32>
    tpu.vector_store %arg6[%29, %c0_21], %28 {strides = array<i32>} : memref<64x128xf32, #tpu.memory_space<vmem>>, vector<8x128xf32>,
    %c2_i32 = arith.constant 2 : i32
    %c8_i32_22 = arith.constant 8 : i32
    %31 = arith.muli %c2_i32, %c8_i32_22 : i32
    %32 = tpu.assume_multiple %31, 8 : i32
    %c0_23 = arith.constant 0 : index
    %c0_24 = arith.constant 0 : index
    %33 = vector.load %arg4[%c0_23, %c0_24] : memref<128x128xf32, #tpu.memory_space<vmem>>, vector<128x128xf32>
    %cst_25 = arith.constant dense<0.000000e+00> : vector<8x128xf32>
    %34 = tpu.matmul %28, %33, %cst_25 {dimension_numbers = #tpu.dot_dimension_numbers<[1], [0], [0], [1], [0, 0, 1, 1], [], []>} : vector<8x128xf32>, vector<128x128xf32>, vector<8x128xf32> -> vector<8x128xf32>
    %35 = arith.index_cast %32 : i32 to index
    %c0_26 = arith.constant 0 : index
    %36 = vector.load %arg8[%35, %c0_26] : memref<64x128xf32, #tpu.memory_space<vmem>>, vector<8x128xf32>
    %37 = arith.addf %36, %34 : vector<8x128xf32>
    %38 = math.tanh %37 : vector<8x128xf32>
    %39 = arith.index_cast %32 : i32 to index
    %c0_27 = arith.constant 0 : index
    %40 = vector.load %arg6[%39, %c0_27] : memref<64x128xf32, #tpu.memory_space<vmem>>, vector<8x128xf32>
    tpu.vector_store %arg6[%39, %c0_27], %38 {strides = array<i32>} : memref<64x128xf32, #tpu.memory_space<vmem>>, vector<8x128xf32>,
    %c3_i32 = arith.constant 3 : i32
    %c8_i32_28 = arith.constant 8 : i32
    %41 = arith.muli %c3_i32, %c8_i32_28 : i32
    %42 = tpu.assume_multiple %41, 8 : i32
    %c0_29 = arith.constant 0 : index
    %c0_30 = arith.constant 0 : index
    %43 = vector.load %arg4[%c0_29, %c0_30] : memref<128x128xf32, #tpu.memory_space<vmem>>, vector<128x128xf32>
    %cst_31 = arith.constant dense<0.000000e+00> : vector<8x128xf32>
    %44 = tpu.matmul %38, %43, %cst_31 {dimension_numbers = #tpu.dot_dimension_numbers<[1], [0], [0], [1], [0, 0, 1, 1], [], []>} : vector<8x128xf32>, vector<128x128xf32>, vector<8x128xf32> -> vector<8x128xf32>
    %45 = arith.index_cast %42 : i32 to index
    %c0_32 = arith.constant 0 : index
    %46 = vector.load %arg8[%45, %c0_32] : memref<64x128xf32, #tpu.memory_space<vmem>>, vector<8x128xf32>
    %47 = arith.addf %46, %44 : vector<8x128xf32>
    %48 = math.tanh %47 : vector<8x128xf32>
    %49 = arith.index_cast %42 : i32 to index
    %c0_33 = arith.constant 0 : index
    %50 = vector.load %arg6[%49, %c0_33] : memref<64x128xf32, #tpu.memory_space<vmem>>, vector<8x128xf32>
    tpu.vector_store %arg6[%49, %c0_33], %48 {strides = array<i32>} : memref<64x128xf32, #tpu.memory_space<vmem>>, vector<8x128xf32>,
    %c4_i32 = arith.constant 4 : i32
    %c8_i32_34 = arith.constant 8 : i32
    %51 = arith.muli %c4_i32, %c8_i32_34 : i32
    %52 = tpu.assume_multiple %51, 8 : i32
    %c0_35 = arith.constant 0 : index
    %c0_36 = arith.constant 0 : index
    %53 = vector.load %arg4[%c0_35, %c0_36] : memref<128x128xf32, #tpu.memory_space<vmem>>, vector<128x128xf32>
    %cst_37 = arith.constant dense<0.000000e+00> : vector<8x128xf32>
    %54 = tpu.matmul %48, %53, %cst_37 {dimension_numbers = #tpu.dot_dimension_numbers<[1], [0], [0], [1], [0, 0, 1, 1], [], []>} : vector<8x128xf32>, vector<128x128xf32>, vector<8x128xf32> -> vector<8x128xf32>
    %55 = arith.index_cast %52 : i32 to index
    %c0_38 = arith.constant 0 : index
    %56 = vector.load %arg8[%55, %c0_38] : memref<64x128xf32, #tpu.memory_space<vmem>>, vector<8x128xf32>
    %57 = arith.addf %56, %54 : vector<8x128xf32>
    %58 = math.tanh %57 : vector<8x128xf32>
    %59 = arith.index_cast %52 : i32 to index
    %c0_39 = arith.constant 0 : index
    %60 = vector.load %arg6[%59, %c0_39] : memref<64x128xf32, #tpu.memory_space<vmem>>, vector<8x128xf32>
    tpu.vector_store %arg6[%59, %c0_39], %58 {strides = array<i32>} : memref<64x128xf32, #tpu.memory_space<vmem>>, vector<8x128xf32>,
    %c5_i32 = arith.constant 5 : i32
    %c8_i32_40 = arith.constant 8 : i32
    %61 = arith.muli %c5_i32, %c8_i32_40 : i32
    %62 = tpu.assume_multiple %61, 8 : i32
    %c0_41 = arith.constant 0 : index
    %c0_42 = arith.constant 0 : index
    %63 = vector.load %arg4[%c0_41, %c0_42] : memref<128x128xf32, #tpu.memory_space<vmem>>, vector<128x128xf32>
    %cst_43 = arith.constant dense<0.000000e+00> : vector<8x128xf32>
    %64 = tpu.matmul %58, %63, %cst_43 {dimension_numbers = #tpu.dot_dimension_numbers<[1], [0], [0], [1], [0, 0, 1, 1], [], []>} : vector<8x128xf32>, vector<128x128xf32>, vector<8x128xf32> -> vector<8x128xf32>
    %65 = arith.index_cast %62 : i32 to index
    %c0_44 = arith.constant 0 : index
    %66 = vector.load %arg8[%65, %c0_44] : memref<64x128xf32, #tpu.memory_space<vmem>>, vector<8x128xf32>
    %67 = arith.addf %66, %64 : vector<8x128xf32>
    %68 = math.tanh %67 : vector<8x128xf32>
    %69 = arith.index_cast %62 : i32 to index
    %c0_45 = arith.constant 0 : index
    %70 = vector.load %arg6[%69, %c0_45] : memref<64x128xf32, #tpu.memory_space<vmem>>, vector<8x128xf32>
    tpu.vector_store %arg6[%69, %c0_45], %68 {strides = array<i32>} : memref<64x128xf32, #tpu.memory_space<vmem>>, vector<8x128xf32>,
    %c6_i32 = arith.constant 6 : i32
    %c8_i32_46 = arith.constant 8 : i32
    %71 = arith.muli %c6_i32, %c8_i32_46 : i32
    %72 = tpu.assume_multiple %71, 8 : i32
    %c0_47 = arith.constant 0 : index
    %c0_48 = arith.constant 0 : index
    %73 = vector.load %arg4[%c0_47, %c0_48] : memref<128x128xf32, #tpu.memory_space<vmem>>, vector<128x128xf32>
    %cst_49 = arith.constant dense<0.000000e+00> : vector<8x128xf32>
    %74 = tpu.matmul %68, %73, %cst_49 {dimension_numbers = #tpu.dot_dimension_numbers<[1], [0], [0], [1], [0, 0, 1, 1], [], []>} : vector<8x128xf32>, vector<128x128xf32>, vector<8x128xf32> -> vector<8x128xf32>
    %75 = arith.index_cast %72 : i32 to index
    %c0_50 = arith.constant 0 : index
    %76 = vector.load %arg8[%75, %c0_50] : memref<64x128xf32, #tpu.memory_space<vmem>>, vector<8x128xf32>
    %77 = arith.addf %76, %74 : vector<8x128xf32>
    %78 = math.tanh %77 : vector<8x128xf32>
    %79 = arith.index_cast %72 : i32 to index
    %c0_51 = arith.constant 0 : index
    %80 = vector.load %arg6[%79, %c0_51] : memref<64x128xf32, #tpu.memory_space<vmem>>, vector<8x128xf32>
    tpu.vector_store %arg6[%79, %c0_51], %78 {strides = array<i32>} : memref<64x128xf32, #tpu.memory_space<vmem>>, vector<8x128xf32>,
    %c7_i32 = arith.constant 7 : i32
    %c8_i32_52 = arith.constant 8 : i32
    %81 = arith.muli %c7_i32, %c8_i32_52 : i32
    %82 = tpu.assume_multiple %81, 8 : i32
    %c0_53 = arith.constant 0 : index
    %c0_54 = arith.constant 0 : index
    %83 = vector.load %arg4[%c0_53, %c0_54] : memref<128x128xf32, #tpu.memory_space<vmem>>, vector<128x128xf32>
    %cst_55 = arith.constant dense<0.000000e+00> : vector<8x128xf32>
    %84 = tpu.matmul %78, %83, %cst_55 {dimension_numbers = #tpu.dot_dimension_numbers<[1], [0], [0], [1], [0, 0, 1, 1], [], []>} : vector<8x128xf32>, vector<128x128xf32>, vector<8x128xf32> -> vector<8x128xf32>
    %85 = arith.index_cast %82 : i32 to index
    %c0_56 = arith.constant 0 : index
    %86 = vector.load %arg8[%85, %c0_56] : memref<64x128xf32, #tpu.memory_space<vmem>>, vector<8x128xf32>
    %87 = arith.addf %86, %84 : vector<8x128xf32>
    %88 = math.tanh %87 : vector<8x128xf32>
    %89 = arith.index_cast %82 : i32 to index
    %c0_57 = arith.constant 0 : index
    %90 = vector.load %arg6[%89, %c0_57] : memref<64x128xf32, #tpu.memory_space<vmem>>, vector<8x128xf32>
    tpu.vector_store %arg6[%89, %c0_57], %88 {strides = array<i32>} : memref<64x128xf32, #tpu.memory_space<vmem>>, vector<8x128xf32>,
    %c8_i32_58 = arith.constant 8 : i32
    %c0_59 = arith.constant 0 : index
    %c0_60 = arith.constant 0 : index
    %91 = vector.load %arg7[%c0_59, %c0_60] : memref<8x128xf32, #tpu.memory_space<vmem>>, vector<8x128xf32>
    tpu.vector_store %arg7[%c0_59, %c0_60], %88 {strides = array<i32>} : memref<8x128xf32, #tpu.memory_space<vmem>>, vector<8x128xf32>,
    return
  }
  func.func @transform_0(%arg0: i32) -> (i32, i32) {
    %c0_i32 = arith.constant 0 : i32
    %c0_i32_0 = arith.constant 0 : i32
    return %arg0, %c0_i32 : i32, i32
  }
  func.func @transform_1(%arg0: i32) -> (i32, i32) {
    %c0_i32 = arith.constant 0 : i32
    %c0_i32_0 = arith.constant 0 : i32
    %c0_i32_1 = arith.constant 0 : i32
    return %c0_i32, %c0_i32_0 : i32, i32
  }
  func.func @transform_2(%arg0: i32) -> (i32, i32) {
    %c0_i32 = arith.constant 0 : i32
    %c0_i32_0 = arith.constant 0 : i32
    %c0_i32_1 = arith.constant 0 : i32
    return %c0_i32, %c0_i32_0 : i32, i32
  }
  func.func @transform_3(%arg0: i32) -> (i32, i32) {
    %c0_i32 = arith.constant 0 : i32
    %c0_i32_0 = arith.constant 0 : i32
    %c0_i32_1 = arith.constant 0 : i32
    return %c0_i32, %c0_i32_0 : i32, i32
  }
  func.func @transform_4(%arg0: i32) -> (i32, i32) {
    %c0_i32 = arith.constant 0 : i32
    %c0_i32_0 = arith.constant 0 : i32
    %c0_i32_1 = arith.constant 0 : i32
    return %c0_i32, %c0_i32_0 : i32, i32
  }
  func.func @transform_5(%arg0: i32) -> (i32, i32) {
    %c0_i32 = arith.constant 0 : i32
    %c0_i32_0 = arith.constant 0 : i32
    return %arg0, %c0_i32 : i32, i32
  }
}

</mosaic_0001>

<llo_original>
// kernel: elman_rnn_forward.1
$region0: #{elman_rnn_forward.1}
  #allocation0 [shape = 'u32[]', space=smem, size = 0x4, offset = 0x4, fixed_abs, tag = 'smem constant byte address 0x4 - core index']
  #allocation1 [shape = 'u32[144,128]{1,0:T(1,128)}', space=vmem, size = 0x12000, scoped, tag = 'internal scratch']
  #allocation2 [shape = 'f32[8,128]{1,0:T(8,128)}', space=vmem, size = 0x1000, scoped, tag = 'scratch operand']
  #allocation3 [shape = 'f32[64,128]{1,0:T(8,128)}', space=vmem, size = 0x8000, scoped, tag = 'scratch operand']
  %s0 = inlined_call_operand.vmem [shape: f32[64,16], index: 0, kind: input, shape index: {}]
  %s1 = inlined_call_operand.vmem [shape: f32[8,128], index: 1, kind: input, shape index: {}]
  %s2 = inlined_call_operand.vmem [shape: f32[16,128], index: 2, kind: input, shape index: {}]
  %s3 = inlined_call_operand.vmem [shape: f32[128,128], index: 3, kind: input, shape index: {}]
  %s4 = inlined_call_operand.vmem [shape: f32[1,128], index: 4, kind: input, shape index: {}]
  %s5 = inlined_call_operand.vmem [shape: f32[64,128], index: 5, kind: output, shape index: {}]
  %s6 = sld [smem:[#allocation0]]
  $region34: #{elman_rnn_forward.1} parent=0
    _
  %s8 = ssub.s32 1, %s6
  %s9 = scalar_select 0, %s8, %s6
  // Predicated region
  $region2: #{elman_rnn_forward.1} parent=0 // pred_check
    _
  $region3: #{elman_rnn_forward.1} parent=0 // pred_check_branch
    %11 = sbr.rel (0) target = $region5
  $region4: #{elman_rnn_forward.1} parent=0 // pred_region
    _
  $region5: #{elman_rnn_forward.1} parent=0 // pred_fallthru
    _
  // Predicated region
  $region6: #{elman_rnn_forward.1} parent=0 // pred_check
    _
  $region7: #{elman_rnn_forward.1} parent=0 // pred_check_branch
    %13 = sbr.rel (0) target = $region9
  $region8: #{elman_rnn_forward.1} parent=0 // pred_region
    _
  $region9: #{elman_rnn_forward.1} parent=0 // pred_fallthru
    _
  // Predicated region
  $region10: #{elman_rnn_forward.1} parent=0 // pred_check
    _
  $region11: #{elman_rnn_forward.1} parent=0 // pred_check_branch
    %15 = sbr.rel (0) target = $region13
  $region12: #{elman_rnn_forward.1} parent=0 // pred_region
    _
  $region13: #{elman_rnn_forward.1} parent=0 // pred_fallthru
    _
  // Predicated region
  $region14: #{elman_rnn_forward.1} parent=0 // pred_check
    _
  $region15: #{elman_rnn_forward.1} parent=0 // pred_check_branch
    %17 = sbr.rel (0) target = $region17
  $region16: #{elman_rnn_forward.1} parent=0 // pred_region
    _
  $region17: #{elman_rnn_forward.1} parent=0 // pred_fallthru
    _
  // Predicated region
  $region18: #{elman_rnn_forward.1} parent=0 // pred_check
    _
  $region19: #{elman_rnn_forward.1} parent=0 // pred_check_branch
    %19 = sbr.rel (0) target = $region21
  $region20: #{elman_rnn_forward.1} parent=0 // pred_region
    _
  $region21: #{elman_rnn_forward.1} parent=0 // pred_fallthru
    _
  %p20 = scmp.eq.s32.totalorder 0, 0
  // Predicated region
  $region22: #{elman_rnn_forward.1} parent=0 // pred_check
    %p21 = pneg %p20
  $region23: #{elman_rnn_forward.1} parent=0 // pred_check_branch
    %23 = sbr.rel (%p21) target = $region25
  $region24: #{elman_rnn_forward.1} parent=0 // pred_region
    %v24 = vld [vmem:[%s1] sm:$0xff]
    %25 = vst [vmem:[#allocation2] sm:$0xff] %v24
  $region25: #{elman_rnn_forward.1} parent=0 // pred_fallthru
    _
  %v26 = vld [vmem:[%s0] sm:$0xff]
  %v27 = vld [vmem:[%s0 + $0x8] sm:$0xff]
  %v28 = vld [vmem:[%s0 + $0x10] sm:$0xff]
  %v29 = vld [vmem:[%s0 + $0x18] sm:$0xff]
  %v30 = vld [vmem:[%s0 + $0x20] sm:$0xff]
  %v31 = vld [vmem:[%s0 + $0x28] sm:$0xff]
  %v32 = vld [vmem:[%s0 + $0x30] sm:$0xff]
  %v33 = vld [vmem:[%s0 + $0x38] sm:$0xff]
  %v34 = vld [vmem:[%s2] sm:$0xff]
  %v35 = vld [vmem:[%s2 + $0x8] sm:$0xff]
  %v36 = vld [vmem:[%s4] sm:$0x1]
  %v38 = vlaneseq
  %v39 = vshrl.u32 %v38, 7
  %v40 = vsub.s32 0, %v39
  %v41 = vrot.slane %v36, %v40
  %vm43 = vcmask 130048
  %v45 = vsel %vm43, %v26, 0
  %v48 = vsel %vm43, %v27, 0
  %v51 = vsel %vm43, %v28, 0
  %v54 = vsel %vm43, %v29, 0
  %v57 = vsel %vm43, %v30, 0
  %v60 = vsel %vm43, %v31, 0
  %v63 = vsel %vm43, %v32, 0
  %v66 = vsel %vm43, %v33, 0
  %68 = vmatprep.subr.mxu0 0.0
  %69 = vmatpush1.msra.mxu0 0.0
  %70 = vmatprep.subr.mxu0 0.0
  %71 = vmatpush1.msra.mxu0 0.0
  %72 = vmatprep.subr.mxu0 0.0
  %73 = vmatpush1.msra.mxu0 0.0
  %74 = vmatprep.subr.mxu0 0.0
  %75 = vmatpush1.msra.mxu0 0.0
  %76 = vmatprep.subr.mxu0 0.0
  %77 = vmatpush1.msra.mxu0 0.0
  %78 = vmatprep.subr.mxu0 0.0
  %79 = vmatpush1.msra.mxu0 0.0
  %80 = vmatprep.subr.mxu0 0.0
  %81 = vmatpush1.msra.mxu0 0.0
  %82 = vmatprep.subr.mxu0 0.0
  %83 = vmatpush1.msra.mxu0 0.0
  %84 = vmatprep.subr.mxu0 0.0
  %85 = vmatpush1.msra.mxu0 0.0
  %86 = vmatprep.subr.mxu0 0.0
  %87 = vmatpush1.msra.mxu0 0.0
  %88 = vmatprep.subr.mxu0 0.0
  %89 = vmatpush1.msra.mxu0 0.0
  %90 = vmatprep.subr.mxu0 0.0
  %91 = vmatpush1.msra.mxu0 0.0
  %92 = vmatprep.subr.mxu0 0.0
  %93 = vmatpush1.msra.mxu0 0.0
  %94 = vmatprep.subr.mxu0 0.0
  %95 = vmatpush1.msra.mxu0 0.0
  %96 = vmatprep.subr.mxu0 0.0
  %97 = vmatpush1.msra.mxu0 %v35
  %98 = vmatprep.subr.mxu0 0.0
  %99 = vmatpush1.msra.mxu0 %v34
  %100 = vmatprep.subr.mxu0 0.0
  %101 = vmatpush2.msra.mxu0 0.0
  %102 = vmatprep.subr.mxu0 0.0
  %103 = vmatpush2.msra.mxu0 0.0
  %104 = vmatprep.subr.mxu0 0.0
  %105 = vmatpush2.msra.mxu0 0.0
  %106 = vmatprep.subr.mxu0 0.0
  %107 = vmatpush2.msra.mxu0 0.0
  %108 = vmatprep.subr.mxu0 0.0
  %109 = vmatpush2.msra.mxu0 0.0
  %110 = vmatprep.subr.mxu0 0.0
  %111 = vmatpush2.msra.mxu0 0.0
  %112 = vmatprep.subr.mxu0 0.0
  %113 = vmatpush2.msra.mxu0 0.0
  %114 = vmatprep.subr.mxu0 0.0
  %115 = vmatpush2.msra.mxu0 0.0
  %116 = vmatprep.subr.mxu0 0.0
  %117 = vmatpush2.msra.mxu0 0.0
  %118 = vmatprep.subr.mxu0 0.0
  %119 = vmatpush2.msra.mxu0 0.0
  %120 = vmatprep.subr.mxu0 0.0
  %121 = vmatpush2.msra.mxu0 0.0
  %122 = vmatprep.subr.mxu0 0.0
  %123 = vmatpush2.msra.mxu0 0.0
  %124 = vmatprep.subr.mxu0 0.0
  %125 = vmatpush2.msra.mxu0 0.0
  %126 = vmatprep.subr.mxu0 0.0
  %127 = vmatpush2.msra.mxu0 0.0
  %128 = vmatprep.subr.mxu0 0.0
  %129 = vmatpush2.msra.mxu0 0.0
  %130 = vmatprep.subr.mxu0 0.0
  %131 = vmatpush2.msra.mxu0 0.0
  %132 = vmatprep.mubr.f32.mxu0 0.0
  %133 = vmatmul.mubr.f32.gmra.mxu0 %v45
  %v134 = vpop.f32.mrf.mxu0
  %v135 = vadd.f32 %v41, %v134
  %v136 = vpop.f32.mrf.mxu0
  %137 = vmatprep.mubr.f32.mxu0 0.0
  %138 = vmatmul.mubr.f32.gmra.mxu0 %v48
  %v139 = vpop.f32.mrf.mxu0
  %v140 = vadd.f32 %v41, %v139
  %v141 = vpop.f32.mrf.mxu0
  %142 = vmatprep.mubr.f32.mxu0 0.0
  %143 = vmatmul.mubr.f32.gmra.mxu0 %v51
  %v144 = vpop.f32.mrf.mxu0
  %v145 = vadd.f32 %v41, %v144
  %v146 = vpop.f32.mrf.mxu0
  %147 = vmatprep.mubr.f32.mxu0 0.0
  %148 = vmatmul.mubr.f32.gmra.mxu0 %v54
  %v149 = vpop.f32.mrf.mxu0
  %v150 = vadd.f32 %v41, %v149
  %v151 = vpop.f32.mrf.mxu0
  %152 = vmatprep.mubr.f32.mxu0 0.0
  %153 = vmatmul.mubr.f32.gmra.mxu0 %v57
  %v154 = vpop.f32.mrf.mxu0
  %v155 = vadd.f32 %v41, %v154
  %v156 = vpop.f32.mrf.mxu0
  %157 = vmatprep.mubr.f32.mxu0 0.0
  %158 = vmatmul.mubr.f32.gmra.mxu0 %v60
  %v159 = vpop.f32.mrf.mxu0
  %v160 = vadd.f32 %v41, %v159
  %v161 = vpop.f32.mrf.mxu0
  %162 = vmatprep.mubr.f32.mxu0 0.0
  %163 = vmatmul.mubr.f32.gmra.mxu0 %v63
  %v164 = vpop.f32.mrf.mxu0
  %v165 = vadd.f32 %v41, %v164
  %v166 = vpop.f32.mrf.mxu0
  %167 = vmatprep.mubr.f32.mxu0 0.0
  %168 = vmatmul.mubr.f32.gmra.mxu0 %v66
  %v169 = vpop.f32.mrf.mxu0
  %v170 = vadd.f32 %v41, %v169
  %v171 = vpop.f32.mrf.mxu0
  %172 = vdwg.mxu0
  %173 = vst [vmem:[#allocation3] sm:$0xff] %v135
  %174 = vst [vmem:[#allocation3 + $0x8] sm:$0xff] %v140
  %175 = vst [vmem:[#allocation3 + $0x10] sm:$0xff] %v145
  %176 = vst [vmem:[#allocation3 + $0x18] sm:$0xff] %v150
  %177 = vst [vmem:[#allocation3 + $0x20] sm:$0xff] %v155
  %178 = vst [vmem:[#allocation3 + $0x28] sm:$0xff] %v160
  %179 = vst [vmem:[#allocation3 + $0x30] sm:$0xff] %v165
  %180 = vst [vmem:[#allocation3 + $0x38] sm:$0xff] %v170
  %v181 = vld [vmem:[#allocation2] sm:$0xff]
  %v182 = vld [vmem:[%s3] sm:$0xff]
  %v183 = vld [vmem:[%s3 + $0x8] sm:$0xff]
  %v184 = vld [vmem:[%s3 + $0x10] sm:$0xff]
  %v185 = vld [vmem:[%s3 + $0x18] sm:$0xff]
  %v186 = vld [vmem:[%s3 + $0x20] sm:$0xff]
  %v187 = vld [vmem:[%s3 + $0x28] sm:$0xff]
  %v188 = vld [vmem:[%s3 + $0x30] sm:$0xff]
  %v189 = vld [vmem:[%s3 + $0x38] sm:$0xff]
  %v190 = vld [vmem:[%s3 + $0x40] sm:$0xff]
  %v191 = vld [vmem:[%s3 + $0x48] sm:$0xff]
  %v192 = vld [vmem:[%s3 + $0x50] sm:$0xff]
  %v193 = vld [vmem:[%s3 + $0x58] sm:$0xff]
  %v194 = vld [vmem:[%s3 + $0x60] sm:$0xff]
  %v195 = vld [vmem:[%s3 + $0x68] sm:$0xff]
  %v196 = vld [vmem:[%s3 + $0x70] sm:$0xff]
  %v197 = vld [vmem:[%s3 + $0x78] sm:$0xff]
  %198 = vmatprep.subr.mxu0 0.0
  %199 = vmatpush1.msra.mxu0 %v197
  %200 = vmatprep.subr.mxu0 0.0
  %201 = vmatpush1.msra.mxu0 %v196
  %202 = vmatprep.subr.mxu0 0.0
  %203 = vmatpush1.msra.mxu0 %v195
  %204 = vmatprep.subr.mxu0 0.0
  %205 = vmatpush1.msra.mxu0 %v194
  %206 = vmatprep.subr.mxu0 0.0
  %207 = vmatpush1.msra.mxu0 %v193
  %208 = vmatprep.subr.mxu0 0.0
  %209 = vmatpush1.msra.mxu0 %v192
  %210 = vmatprep.subr.mxu0 0.0
  %211 = vmatpush1.msra.mxu0 %v191
  %212 = vmatprep.subr.mxu0 0.0
  %213 = vmatpush1.msra.mxu0 %v190
  %214 = vmatprep.subr.mxu0 0.0
  %215 = vmatpush1.msra.mxu0 %v189
  %216 = vmatprep.subr.mxu0 0.0
  %217 = vmatpush1.msra.mxu0 %v188
  %218 = vmatprep.subr.mxu0 0.0
  %219 = vmatpush1.msra.mxu0 %v187
  %220 = vmatprep.subr.mxu0 0.0
  %221 = vmatpush1.msra.mxu0 %v186
  %222 = vmatprep.subr.mxu0 0.0
  %223 = vmatpush1.msra.mxu0 %v185
  %224 = vmatprep.subr.mxu0 0.0
  %225 = vmatpush1.msra.mxu0 %v184
  %226 = vmatprep.subr.mxu0 0.0
  %227 = vmatpush1.msra.mxu0 %v183
  %228 = vmatprep.subr.mxu0 0.0
  %229 = vmatpush1.msra.mxu0 %v182
  %230 = vmatprep.subr.mxu0 0.0
  %231 = vmatpush2.msra.mxu0 0.0
  %232 = vmatprep.subr.mxu0 0.0
  %233 = vmatpush2.msra.mxu0 0.0
  %234 = vmatprep.subr.mxu0 0.0
  %235 = vmatpush2.msra.mxu0 0.0
  %236 = vmatprep.subr.mxu0 0.0
  %237 = vmatpush2.msra.mxu0 0.0
  %238 = vmatprep.subr.mxu0 0.0
  %239 = vmatpush2.msra.mxu0 0.0
  %240 = vmatprep.subr.mxu0 0.0
  %241 = vmatpush2.msra.mxu0 0.0
  %242 = vmatprep.subr.mxu0 0.0
  %243 = vmatpush2.msra.mxu0 0.0
  %244 = vmatprep.subr.mxu0 0.0
  %245 = vmatpush2.msra.mxu0 0.0
  %246 = vmatprep.subr.mxu0 0.0
  %247 = vmatpush2.msra.mxu0 0.0
  %248 = vmatprep.subr.mxu0 0.0
  %249 = vmatpush2.msra.mxu0 0.0
  %250 = vmatprep.subr.mxu0 0.0
  %251 = vmatpush2.msra.mxu0 0.0
  %252 = vmatprep.subr.mxu0 0.0
  %253 = vmatpush2.msra.mxu0 0.0
  %254 = vmatprep.subr.mxu0 0.0
  %255 = vmatpush2.msra.mxu0 0.0
  %256 = vmatprep.subr.mxu0 0.0
  %257 = vmatpush2.msra.mxu0 0.0
  %258 = vmatprep.subr.mxu0 0.0
  %259 = vmatpush2.msra.mxu0 0.0
  %260 = vmatprep.subr.mxu0 0.0
  %261 = vmatpush2.msra.mxu0 0.0
  %262 = vmatprep.mubr.f32.mxu0 0.0
  %263 = vmatmul.mubr.f32.gmra.mxu0 %v181
  %v264 = vpop.f32.mrf.mxu0
  %v265 = vadd.f32 0.0, %v264
  %v266 = vpop.f32.mrf.mxu0
  %267 = vdwg.mxu0
  %v268 = vld [vmem:[#allocation3] sm:$0xff]
  %v269 = vadd.f32 %v268, %v265
  %v270 = vtanh.pop %v269
  %271 = vst [vmem:[%s5] sm:$0xff] %v270
  %v272 = vld [vmem:[%s3] sm:$0xff]
  %v273 = vld [vmem:[%s3 + $0x8] sm:$0xff]
  %v274 = vld [vmem:[%s3 + $0x10] sm:$0xff]
  %v275 = vld [vmem:[%s3 + $0x18] sm:$0xff]
  %v276 = vld [vmem:[%s3 + $0x20] sm:$0xff]
  %v277 = vld [vmem:[%s3 + $0x28] sm:$0xff]
  %v278 = vld [vmem:[%s3 + $0x30] sm:$0xff]
  %v279 = vld [vmem:[%s3 + $0x38] sm:$0xff]
  %v280 = vld [vmem:[%s3 + $0x40] sm:$0xff]
  %v281 = vld [vmem:[%s3 + $0x48] sm:$0xff]
  %v282 = vld [vmem:[%s3 + $0x50] sm:$0xff]
  %v283 = vld [vmem:[%s3 + $0x58] sm:$0xff]
  %v284 = vld [vmem:[%s3 + $0x60] sm:$0xff]
  %v285 = vld [vmem:[%s3 + $0x68] sm:$0xff]
  %v286 = vld [vmem:[%s3 + $0x70] sm:$0xff]
  %v287 = vld [vmem:[%s3 + $0x78] sm:$0xff]
  %288 = vmatprep.subr.mxu0 0.0
  %289 = vmatpush1.msra.mxu0 %v287
  %290 = vmatprep.subr.mxu0 0.0
  %291 = vmatpush1.msra.mxu0 %v286
  %292 = vmatprep.subr.mxu0 0.0
  %293 = vmatpush1.msra.mxu0 %v285
  %294 = vmatprep.subr.mxu0 0.0
  %295 = vmatpush1.msra.mxu0 %v284
  %296 = vmatprep.subr.mxu0 0.0
  %297 = vmatpush1.msra.mxu0 %v283
  %298 = vmatprep.subr.mxu0 0.0
  %299 = vmatpush1.msra.mxu0 %v282
  %300 = vmatprep.subr.mxu0 0.0
  %301 = vmatpush1.msra.mxu0 %v281
  %302 = vmatprep.subr.mxu0 0.0
  %303 = vmatpush1.msra.mxu0 %v280
  %304 = vmatprep.subr.mxu0 0.0
  %305 = vmatpush1.msra.mxu0 %v279
  %306 = vmatprep.subr.mxu0 0.0
  %307 = vmatpush1.msra.mxu0 %v278
  %308 = vmatprep.subr.mxu0 0.0
  %309 = vmatpush1.msra.mxu0 %v277
  %310 = vmatprep.subr.mxu0 0.0
  %311 = vmatpush1.msra.mxu0 %v276
  %312 = vmatprep.subr.mxu0 0.0
  %313 = vmatpush1.msra.mxu0 %v275
  %314 = vmatprep.subr.mxu0 0.0
  %315 = vmatpush1.msra.mxu0 %v274
  %316 = vmatprep.subr.mxu0 0.0
  %317 = vmatpush1.msra.mxu0 %v273
  %318 = vmatprep.subr.mxu0 0.0
  %319 = vmatpush1.msra.mxu0 %v272
  %320 = vmatprep.subr.mxu0 0.0
  %321 = vmatpush2.msra.mxu0 0.0
  %322 = vmatprep.subr.mxu0 0.0
  %323 = vmatpush2.msra.mxu0 0.0
  %324 = vmatprep.subr.mxu0 0.0
  %325 = vmatpush2.msra.mxu0 0.0
  %326 = vmatprep.subr.mxu0 0.0
  %327 = vmatpush2.msra.mxu0 0.0
  %328 = vmatprep.subr.mxu0 0.0
  %329 = vmatpush2.msra.mxu0 0.0
  %330 = vmatprep.subr.mxu0 0.0
  %331 = vmatpush2.msra.mxu0 0.0
  %332 = vmatprep.subr.mxu0 0.0
  %333 = vmatpush2.msra.mxu0 0.0
  %334 = vmatprep.subr.mxu0 0.0
  %335 = vmatpush2.msra.mxu0 0.0
  %336 = vmatprep.subr.mxu0 0.0
  %337 = vmatpush2.msra.mxu0 0.0
  %338 = vmatprep.subr.mxu0 0.0
  %339 = vmatpush2.msra.mxu0 0.0
  %340 = vmatprep.subr.mxu0 0.0
  %341 = vmatpush2.msra.mxu0 0.0
  %342 = vmatprep.subr.mxu0 0.0
  %343 = vmatpush2.msra.mxu0 0.0
  %344 = vmatprep.subr.mxu0 0.0
  %345 = vmatpush2.msra.mxu0 0.0
  %346 = vmatprep.subr.mxu0 0.0
  %347 = vmatpush2.msra.mxu0 0.0
  %348 = vmatprep.subr.mxu0 0.0
  %349 = vmatpush2.msra.mxu0 0.0
  %350 = vmatprep.subr.mxu0 0.0
  %351 = vmatpush2.msra.mxu0 0.0
  %352 = vmatprep.mubr.f32.mxu0 0.0
  %353 = vmatmul.mubr.f32.gmra.mxu0 %v270
  %v354 = vpop.f32.mrf.mxu0
  %v355 = vadd.f32 0.0, %v354
  %v356 = vpop.f32.mrf.mxu0
  %357 = vdwg.mxu0
  %s358 = scalar_lea.vmem [#allocation3], 8
  %v359 = vld [vmem:[%s358] sm:$0xff]
  %v360 = vadd.f32 %v359, %v355
  %v361 = vtanh.pop %v360
  %s362 = scalar_lea.vmem %s5, 8
  %363 = vst [vmem:[%s362] sm:$0xff] %v361
  %v364 = vld [vmem:[%s3] sm:$0xff]
  %v365 = vld [vmem:[%s3 + $0x8] sm:$0xff]
  %v366 = vld [vmem:[%s3 + $0x10] sm:$0xff]
  %v367 = vld [vmem:[%s3 + $0x18] sm:$0xff]
  %v368 = vld [vmem:[%s3 + $0x20] sm:$0xff]
  %v369 = vld [vmem:[%s3 + $0x28] sm:$0xff]
  %v370 = vld [vmem:[%s3 + $0x30] sm:$0xff]
  %v371 = vld [vmem:[%s3 + $0x38] sm:$0xff]
  %v372 = vld [vmem:[%s3 + $0x40] sm:$0xff]
  %v373 = vld [vmem:[%s3 + $0x48] sm:$0xff]
  %v374 = vld [vmem:[%s3 + $0x50] sm:$0xff]
  %v375 = vld [vmem:[%s3 + $0x58] sm:$0xff]
  %v376 = vld [vmem:[%s3 + $0x60] sm:$0xff]
  %v377 = vld [vmem:[%s3 + $0x68] sm:$0xff]
  %v378 = vld [vmem:[%s3 + $0x70] sm:$0xff]
  %v379 = vld [vmem:[%s3 + $0x78] sm:$0xff]
  %380 = vmatprep.subr.mxu0 0.0
  %381 = vmatpush1.msra.mxu0 %v379
  %382 = vmatprep.subr.mxu0 0.0
  %383 = vmatpush1.msra.mxu0 %v378
  %384 = vmatprep.subr.mxu0 0.0
  %385 = vmatpush1.msra.mxu0 %v377
  %386 = vmatprep.subr.mxu0 0.0
  %387 = vmatpush1.msra.mxu0 %v376
  %388 = vmatprep.subr.mxu0 0.0
  %389 = vmatpush1.msra.mxu0 %v375
  %390 = vmatprep.subr.mxu0 0.0
  %391 = vmatpush1.msra.mxu0 %v374
  %392 = vmatprep.subr.mxu0 0.0
  %393 = vmatpush1.msra.mxu0 %v373
  %394 = vmatprep.subr.mxu0 0.0
  %395 = vmatpush1.msra.mxu0 %v372
  %396 = vmatprep.subr.mxu0 0.0
  %397 = vmatpush1.msra.mxu0 %v371
  %398 = vmatprep.subr.mxu0 0.0
  %399 = vmatpush1.msra.mxu0 %v370
  %400 = vmatprep.subr.mxu0 0.0
  %401 = vmatpush1.msra.mxu0 %v369
  %402 = vmatprep.subr.mxu0 0.0
  %403 = vmatpush1.msra.mxu0 %v368
  %404 = vmatprep.subr.mxu0 0.0
  %405 = vmatpush1.msra.mxu0 %v367
  %406 = vmatprep.subr.mxu0 0.0
  %407 = vmatpush1.msra.mxu0 %v366
  %408 = vmatprep.subr.mxu0 0.0
  %409 = vmatpush1.msra.mxu0 %v365
  %410 = vmatprep.subr.mxu0 0.0
  %411 = vmatpush1.msra.mxu0 %v364
  %412 = vmatprep.subr.mxu0 0.0
  %413 = vmatpush2.msra.mxu0 0.0
  %414 = vmatprep.subr.mxu0 0.0
  %415 = vmatpush2.msra.mxu0 0.0
  %416 = vmatprep.subr.mxu0 0.0
  %417 = vmatpush2.msra.mxu0 0.0
  %418 = vmatprep.subr.mxu0 0.0
  %419 = vmatpush2.msra.mxu0 0.0
  %420 = vmatprep.subr.mxu0 0.0
  %421 = vmatpush2.msra.mxu0 0.0
  %422 = vmatprep.subr.mxu0 0.0
  %423 = vmatpush2.msra.mxu0 0.0
  %424 = vmatprep.subr.mxu0 0.0
  %425 = vmatpush2.msra.mxu0 0.0
  %426 = vmatprep.subr.mxu0 0.0
  %427 = vmatpush2.msra.mxu0 0.0
  %428 = vmatprep.subr.mxu0 0.0
  %429 = vmatpush2.msra.mxu0 0.0
  %430 = vmatprep.subr.mxu0 0.0
  %431 = vmatpush2.msra.mxu0 0.0
  %432 = vmatprep.subr.mxu0 0.0
  %433 = vmatpush2.msra.mxu0 0.0
  %434 = vmatprep.subr.mxu0 0.0
  %435 = vmatpush2.msra.mxu0 0.0
  %436 = vmatprep.subr.mxu0 0.0
  %437 = vmatpush2.msra.mxu0 0.0
  %438 = vmatprep.subr.mxu0 0.0
  %439 = vmatpush2.msra.mxu0 0.0
  %440 = vmatprep.subr.mxu0 0.0
  %441 = vmatpush2.msra.mxu0 0.0
  %442 = vmatprep.subr.mxu0 0.0
  %443 = vmatpush2.msra.mxu0 0.0
  %444 = vmatprep.mubr.f32.mxu0 0.0
  %445 = vmatmul.mubr.f32.gmra.mxu0 %v361
  %v446 = vpop.f32.mrf.mxu0
  %v447 = vadd.f32 0.0, %v446
  %v448 = vpop.f32.mrf.mxu0
  %449 = vdwg.mxu0
  %s450 = scalar_lea.vmem [#allocation3], 16
  %v451 = vld [vmem:[%s450] sm:$0xff]
  %v452 = vadd.f32 %v451, %v447
  %v453 = vtanh.pop %v452
  %s454 = scalar_lea.vmem %s5, 16
  %455 = vst [vmem:[%s454] sm:$0xff] %v453
  %v456 = vld [vmem:[%s3] sm:$0xff]
  %v457 = vld [vmem:[%s3 + $0x8] sm:$0xff]
  %v458 = vld [vmem:[%s3 + $0x10] sm:$0xff]
  %v459 = vld [vmem:[%s3 + $0x18] sm:$0xff]
  %v460 = vld [vmem:[%s3 + $0x20] sm:$0xff]
  %v461 = vld [vmem:[%s3 + $0x28] sm:$0xff]
  %v462 = vld [vmem:[%s3 + $0x30] sm:$0xff]
  %v463 = vld [vmem:[%s3 + $0x38] sm:$0xff]
  %v464 = vld [vmem:[%s3 + $0x40] sm:$0xff]
  %v465 = vld [vmem:[%s3 + $0x48] sm:$0xff]
  %v466 = vld [vmem:[%s3 + $0x50] sm:$0xff]
  %v467 = vld [vmem:[%s3 + $0x58] sm:$0xff]
  %v468 = vld [vmem:[%s3 + $0x60] sm:$0xff]
  %v469 = vld [vmem:[%s3 + $0x68] sm:$0xff]
  %v470 = vld [vmem:[%s3 + $0x70] sm:$0xff]
  %v471 = vld [vmem:[%s3 + $0x78] sm:$0xff]
  %472 = vmatprep.subr.mxu0 0.0
  %473 = vmatpush1.msra.mxu0 %v471
  %474 = vmatprep.subr.mxu0 0.0
  %475 = vmatpush1.msra.mxu0 %v470
  %476 = vmatprep.subr.mxu0 0.0
  %477 = vmatpush1.msra.mxu0 %v469
  %478 = vmatprep.subr.mxu0 0.0
  %479 = vmatpush1.msra.mxu0 %v468
  %480 = vmatprep.subr.mxu0 0.0
  %481 = vmatpush1.msra.mxu0 %v467
  %482 = vmatprep.subr.mxu0 0.0
  %483 = vmatpush1.msra.mxu0 %v466
  %484 = vmatprep.subr.mxu0 0.0
  %485 = vmatpush1.msra.mxu0 %v465
  %486 = vmatprep.subr.mxu0 0.0
  %487 = vmatpush1.msra.mxu0 %v464
  %488 = vmatprep.subr.mxu0 0.0
  %489 = vmatpush1.msra.mxu0 %v463
  %490 = vmatprep.subr.mxu0 0.0
  %491 = vmatpush1.msra.mxu0 %v462
  %492 = vmatprep.subr.mxu0 0.0
  %493 = vmatpush1.msra.mxu0 %v461
  %494 = vmatprep.subr.mxu0 0.0
  %495 = vmatpush1.msra.mxu0 %v460
  %496 = vmatprep.subr.mxu0 0.0
  %497 = vmatpush1.msra.mxu0 %v459
  %498 = vmatprep.subr.mxu0 0.0
  %499 = vmatpush1.msra.mxu0 %v458
  %500 = vmatprep.subr.mxu0 0.0
  %501 = vmatpush1.msra.mxu0 %v457
  %502 = vmatprep.subr.mxu0 0.0
  %503 = vmatpush1.msra.mxu0 %v456
  %504 = vmatprep.subr.mxu0 0.0
  %505 = vmatpush2.msra.mxu0 0.0
  %506 = vmatprep.subr.mxu0 0.0
  %507 = vmatpush2.msra.mxu0 0.0
  %508 = vmatprep.subr.mxu0 0.0
  %509 = vmatpush2.msra.mxu0 0.0
  %510 = vmatprep.subr.mxu0 0.0
  %511 = vmatpush2.msra.mxu0 0.0
  %512 = vmatprep.subr.mxu0 0.0
  %513 = vmatpush2.msra.mxu0 0.0
  %514 = vmatprep.subr.mxu0 0.0
  %515 = vmatpush2.msra.mxu0 0.0
  %516 = vmatprep.subr.mxu0 0.0
  %517 = vmatpush2.msra.mxu0 0.0
  %518 = vmatprep.subr.mxu0 0.0
  %519 = vmatpush2.msra.mxu0 0.0
  %520 = vmatprep.subr.mxu0 0.0
  %521 = vmatpush2.msra.mxu0 0.0
  %522 = vmatprep.subr.mxu0 0.0
  %523 = vmatpush2.msra.mxu0 0.0
  %524 = vmatprep.subr.mxu0 0.0
  %525 = vmatpush2.msra.mxu0 0.0
  %526 = vmatprep.subr.mxu0 0.0
  %527 = vmatpush2.msra.mxu0 0.0
  %528 = vmatprep.subr.mxu0 0.0
  %529 = vmatpush2.msra.mxu0 0.0
  %530 = vmatprep.subr.mxu0 0.0
  %531 = vmatpush2.msra.mxu0 0.0
  %532 = vmatprep.subr.mxu0 0.0
  %533 = vmatpush2.msra.mxu0 0.0
  %534 = vmatprep.subr.mxu0 0.0
  %535 = vmatpush2.msra.mxu0 0.0
  %536 = vmatprep.mubr.f32.mxu0 0.0
  %537 = vmatmul.mubr.f32.gmra.mxu0 %v453
  %v538 = vpop.f32.mrf.mxu0
  %v539 = vadd.f32 0.0, %v538
  %v540 = vpop.f32.mrf.mxu0
  %541 = vdwg.mxu0
  %s542 = scalar_lea.vmem [#allocation3], 24
  %v543 = vld [vmem:[%s542] sm:$0xff]
  %v544 = vadd.f32 %v543, %v539
  %v545 = vtanh.pop %v544
  %s546 = scalar_lea.vmem %s5, 24
  %547 = vst [vmem:[%s546] sm:$0xff] %v545
  %v548 = vld [vmem:[%s3] sm:$0xff]
  %v549 = vld [vmem:[%s3 + $0x8] sm:$0xff]
  %v550 = vld [vmem:[%s3 + $0x10] sm:$0xff]
  %v551 = vld [vmem:[%s3 + $0x18] sm:$0xff]
  %v552 = vld [vmem:[%s3 + $0x20] sm:$0xff]
  %v553 = vld [vmem:[%s3 + $0x28] sm:$0xff]
  %v554 = vld [vmem:[%s3 + $0x30] sm:$0xff]
  %v555 = vld [vmem:[%s3 + $0x38] sm:$0xff]
  %v556 = vld [vmem:[%s3 + $0x40] sm:$0xff]
  %v557 = vld [vmem:[%s3 + $0x48] sm:$0xff]
  %v558 = vld [vmem:[%s3 + $0x50] sm:$0xff]
  %v559 = vld [vmem:[%s3 + $0x58] sm:$0xff]
  %v560 = vld [vmem:[%s3 + $0x60] sm:$0xff]
  %v561 = vld [vmem:[%s3 + $0x68] sm:$0xff]
  %v562 = vld [vmem:[%s3 + $0x70] sm:$0xff]
  %v563 = vld [vmem:[%s3 + $0x78] sm:$0xff]
  %564 = vmatprep.subr.mxu0 0.0
  %565 = vmatpush1.msra.mxu0 %v563
  %566 = vmatprep.subr.mxu0 0.0
  %567 = vmatpush1.msra.mxu0 %v562
  %568 = vmatprep.subr.mxu0 0.0
  %569 = vmatpush1.msra.mxu0 %v561
  %570 = vmatprep.subr.mxu0 0.0
  %571 = vmatpush1.msra.mxu0 %v560
  %572 = vmatprep.subr.mxu0 0.0
  %573 = vmatpush1.msra.mxu0 %v559
  %574 = vmatprep.subr.mxu0 0.0
  %575 = vmatpush1.msra.mxu0 %v558
  %576 = vmatprep.subr.mxu0 0.0
  %577 = vmatpush1.msra.mxu0 %v557
  %578 = vmatprep.subr.mxu0 0.0
  %579 = vmatpush1.msra.mxu0 %v556
  %580 = vmatprep.subr.mxu0 0.0
  %581 = vmatpush1.msra.mxu0 %v555
  %582 = vmatprep.subr.mxu0 0.0
  %583 = vmatpush1.msra.mxu0 %v554
  %584 = vmatprep.subr.mxu0 0.0
  %585 = vmatpush1.msra.mxu0 %v553
  %586 = vmatprep.subr.mxu0 0.0
  %587 = vmatpush1.msra.mxu0 %v552
  %588 = vmatprep.subr.mxu0 0.0
  %589 = vmatpush1.msra.mxu0 %v551
  %590 = vmatprep.subr.mxu0 0.0
  %591 = vmatpush1.msra.mxu0 %v550
  %592 = vmatprep.subr.mxu0 0.0
  %593 = vmatpush1.msra.mxu0 %v549
  %594 = vmatprep.subr.mxu0 0.0
  %595 = vmatpush1.msra.mxu0 %v548
  %596 = vmatprep.subr.mxu0 0.0
  %597 = vmatpush2.msra.mxu0 0.0
  %598 = vmatprep.subr.mxu0 0.0
  %599 = vmatpush2.msra.mxu0 0.0
  %600 = vmatprep.subr.mxu0 0.0
  %601 = vmatpush2.msra.mxu0 0.0
  %602 = vmatprep.subr.mxu0 0.0
  %603 = vmatpush2.msra.mxu0 0.0
  %604 = vmatprep.subr.mxu0 0.0
  %605 = vmatpush2.msra.mxu0 0.0
  %606 = vmatprep.subr.mxu0 0.0
  %607 = vmatpush2.msra.mxu0 0.0
  %608 = vmatprep.subr.mxu0 0.0
  %609 = vmatpush2.msra.mxu0 0.0
  %610 = vmatprep.subr.mxu0 0.0
  %611 = vmatpush2.msra.mxu0 0.0
  %612 = vmatprep.subr.mxu0 0.0
  %613 = vmatpush2.msra.mxu0 0.0
  %614 = vmatprep.subr.mxu0 0.0
  %615 = vmatpush2.msra.mxu0 0.0
  %616 = vmatprep.subr.mxu0 0.0
  %617 = vmatpush2.msra.mxu0 0.0
  %618 = vmatprep.subr.mxu0 0.0
  %619 = vmatpush2.msra.mxu0 0.0
  %620 = vmatprep.subr.mxu0 0.0
  %621 = vmatpush2.msra.mxu0 0.0
  %622 = vmatprep.subr.mxu0 0.0
  %623 = vmatpush2.msra.mxu0 0.0
  %624 = vmatprep.subr.mxu0 0.0
  %625 = vmatpush2.msra.mxu0 0.0
  %626 = vmatprep.subr.mxu0 0.0
  %627 = vmatpush2.msra.mxu0 0.0
  %628 = vmatprep.mubr.f32.mxu0 0.0
  %629 = vmatmul.mubr.f32.gmra.mxu0 %v545
  %v630 = vpop.f32.mrf.mxu0
  %v631 = vadd.f32 0.0, %v630
  %v632 = vpop.f32.mrf.mxu0
  %633 = vdwg.mxu0
  %s634 = scalar_lea.vmem [#allocation3], 32
  %v635 = vld [vmem:[%s634] sm:$0xff]
  %v636 = vadd.f32 %v635, %v631
  %v637 = vtanh.pop %v636
  %s638 = scalar_lea.vmem %s5, 32
  %639 = vst [vmem:[%s638] sm:$0xff] %v637
  %v640 = vld [vmem:[%s3] sm:$0xff]
  %v641 = vld [vmem:[%s3 + $0x8] sm:$0xff]
  %v642 = vld [vmem:[%s3 + $0x10] sm:$0xff]
  %v643 = vld [vmem:[%s3 + $0x18] sm:$0xff]
  %v644 = vld [vmem:[%s3 + $0x20] sm:$0xff]
  %v645 = vld [vmem:[%s3 + $0x28] sm:$0xff]
  %v646 = vld [vmem:[%s3 + $0x30] sm:$0xff]
  %v647 = vld [vmem:[%s3 + $0x38] sm:$0xff]
  %v648 = vld [vmem:[%s3 + $0x40] sm:$0xff]
  %v649 = vld [vmem:[%s3 + $0x48] sm:$0xff]
  %v650 = vld [vmem:[%s3 + $0x50] sm:$0xff]
  %v651 = vld [vmem:[%s3 + $0x58] sm:$0xff]
  %v652 = vld [vmem:[%s3 + $0x60] sm:$0xff]
  %v653 = vld [vmem:[%s3 + $0x68] sm:$0xff]
  %v654 = vld [vmem:[%s3 + $0x70] sm:$0xff]
  %v655 = vld [vmem:[%s3 + $0x78] sm:$0xff]
  %656 = vmatprep.subr.mxu0 0.0
  %657 = vmatpush1.msra.mxu0 %v655
  %658 = vmatprep.subr.mxu0 0.0
  %659 = vmatpush1.msra.mxu0 %v654
  %660 = vmatprep.subr.mxu0 0.0
  %661 = vmatpush1.msra.mxu0 %v653
  %662 = vmatprep.subr.mxu0 0.0
  %663 = vmatpush1.msra.mxu0 %v652
  %664 = vmatprep.subr.mxu0 0.0
  %665 = vmatpush1.msra.mxu0 %v651
  %666 = vmatprep.subr.mxu0 0.0
  %667 = vmatpush1.msra.mxu0 %v650
  %668 = vmatprep.subr.mxu0 0.0
  %669 = vmatpush1.msra.mxu0 %v649
  %670 = vmatprep.subr.mxu0 0.0
  %671 = vmatpush1.msra.mxu0 %v648
  %672 = vmatprep.subr.mxu0 0.0
  %673 = vmatpush1.msra.mxu0 %v647
  %674 = vmatprep.subr.mxu0 0.0
  %675 = vmatpush1.msra.mxu0 %v646
  %676 = vmatprep.subr.mxu0 0.0
  %677 = vmatpush1.msra.mxu0 %v645
  %678 = vmatprep.subr.mxu0 0.0
  %679 = vmatpush1.msra.mxu0 %v644
  %680 = vmatprep.subr.mxu0 0.0
  %681 = vmatpush1.msra.mxu0 %v643
  %682 = vmatprep.subr.mxu0 0.0
  %683 = vmatpush1.msra.mxu0 %v642
  %684 = vmatprep.subr.mxu0 0.0
  %685 = vmatpush1.msra.mxu0 %v641
  %686 = vmatprep.subr.mxu0 0.0
  %687 = vmatpush1.msra.mxu0 %v640
  %688 = vmatprep.subr.mxu0 0.0
  %689 = vmatpush2.msra.mxu0 0.0
  %690 = vmatprep.subr.mxu0 0.0
  %691 = vmatpush2.msra.mxu0 0.0
  %692 = vmatprep.subr.mxu0 0.0
  %693 = vmatpush2.msra.mxu0 0.0
  %694 = vmatprep.subr.mxu0 0.0
  %695 = vmatpush2.msra.mxu0 0.0
  %696 = vmatprep.subr.mxu0 0.0
  %697 = vmatpush2.msra.mxu0 0.0
  %698 = vmatprep.subr.mxu0 0.0
  %699 = vmatpush2.msra.mxu0 0.0
  %700 = vmatprep.subr.mxu0 0.0
  %701 = vmatpush2.msra.mxu0 0.0
  %702 = vmatprep.subr.mxu0 0.0
  %703 = vmatpush2.msra.mxu0 0.0
  %704 = vmatprep.subr.mxu0 0.0
  %705 = vmatpush2.msra.mxu0 0.0
  %706 = vmatprep.subr.mxu0 0.0
  %707 = vmatpush2.msra.mxu0 0.0
  %708 = vmatprep.subr.mxu0 0.0
  %709 = vmatpush2.msra.mxu0 0.0
  %710 = vmatprep.subr.mxu0 0.0
  %711 = vmatpush2.msra.mxu0 0.0
  %712 = vmatprep.subr.mxu0 0.0
  %713 = vmatpush2.msra.mxu0 0.0
  %714 = vmatprep.subr.mxu0 0.0
  %715 = vmatpush2.msra.mxu0 0.0
  %716 = vmatprep.subr.mxu0 0.0
  %717 = vmatpush2.msra.mxu0 0.0
  %718 = vmatprep.subr.mxu0 0.0
  %719 = vmatpush2.msra.mxu0 0.0
  %720 = vmatprep.mubr.f32.mxu0 0.0
  %721 = vmatmul.mubr.f32.gmra.mxu0 %v637
  %v722 = vpop.f32.mrf.mxu0
  %v723 = vadd.f32 0.0, %v722
  %v724 = vpop.f32.mrf.mxu0
  %725 = vdwg.mxu0
  %s726 = scalar_lea.vmem [#allocation3], 40
  %v727 = vld [vmem:[%s726] sm:$0xff]
  %v728 = vadd.f32 %v727, %v723
  %v729 = vtanh.pop %v728
  %s730 = scalar_lea.vmem %s5, 40
  %731 = vst [vmem:[%s730] sm:$0xff] %v729
  %v732 = vld [vmem:[%s3] sm:$0xff]
  %v733 = vld [vmem:[%s3 + $0x8] sm:$0xff]
  %v734 = vld [vmem:[%s3 + $0x10] sm:$0xff]
  %v735 = vld [vmem:[%s3 + $0x18] sm:$0xff]
  %v736 = vld [vmem:[%s3 + $0x20] sm:$0xff]
  %v737 = vld [vmem:[%s3 + $0x28] sm:$0xff]
  %v738 = vld [vmem:[%s3 + $0x30] sm:$0xff]
  %v739 = vld [vmem:[%s3 + $0x38] sm:$0xff]
  %v740 = vld [vmem:[%s3 + $0x40] sm:$0xff]
  %v741 = vld [vmem:[%s3 + $0x48] sm:$0xff]
  %v742 = vld [vmem:[%s3 + $0x50] sm:$0xff]
  %v743 = vld [vmem:[%s3 + $0x58] sm:$0xff]
  %v744 = vld [vmem:[%s3 + $0x60] sm:$0xff]
  %v745 = vld [vmem:[%s3 + $0x68] sm:$0xff]
  %v746 = vld [vmem:[%s3 + $0x70] sm:$0xff]
  %v747 = vld [vmem:[%s3 + $0x78] sm:$0xff]
  %748 = vmatprep.subr.mxu0 0.0
  %749 = vmatpush1.msra.mxu0 %v747
  %750 = vmatprep.subr.mxu0 0.0
  %751 = vmatpush1.msra.mxu0 %v746
  %752 = vmatprep.subr.mxu0 0.0
  %753 = vmatpush1.msra.mxu0 %v745
  %754 = vmatprep.subr.mxu0 0.0
  %755 = vmatpush1.msra.mxu0 %v744
  %756 = vmatprep.subr.mxu0 0.0
  %757 = vmatpush1.msra.mxu0 %v743
  %758 = vmatprep.subr.mxu0 0.0
  %759 = vmatpush1.msra.mxu0 %v742
  %760 = vmatprep.subr.mxu0 0.0
  %761 = vmatpush1.msra.mxu0 %v741
  %762 = vmatprep.subr.mxu0 0.0
  %763 = vmatpush1.msra.mxu0 %v740
  %764 = vmatprep.subr.mxu0 0.0
  %765 = vmatpush1.msra.mxu0 %v739
  %766 = vmatprep.subr.mxu0 0.0
  %767 = vmatpush1.msra.mxu0 %v738
  %768 = vmatprep.subr.mxu0 0.0
  %769 = vmatpush1.msra.mxu0 %v737
  %770 = vmatprep.subr.mxu0 0.0
  %771 = vmatpush1.msra.mxu0 %v736
  %772 = vmatprep.subr.mxu0 0.0
  %773 = vmatpush1.msra.mxu0 %v735
  %774 = vmatprep.subr.mxu0 0.0
  %775 = vmatpush1.msra.mxu0 %v734
  %776 = vmatprep.subr.mxu0 0.0
  %777 = vmatpush1.msra.mxu0 %v733
  %778 = vmatprep.subr.mxu0 0.0
  %779 = vmatpush1.msra.mxu0 %v732
  %780 = vmatprep.subr.mxu0 0.0
  %781 = vmatpush2.msra.mxu0 0.0
  %782 = vmatprep.subr.mxu0 0.0
  %783 = vmatpush2.msra.mxu0 0.0
  %784 = vmatprep.subr.mxu0 0.0
  %785 = vmatpush2.msra.mxu0 0.0
  %786 = vmatprep.subr.mxu0 0.0
  %787 = vmatpush2.msra.mxu0 0.0
  %788 = vmatprep.subr.mxu0 0.0
  %789 = vmatpush2.msra.mxu0 0.0
  %790 = vmatprep.subr.mxu0 0.0
  %791 = vmatpush2.msra.mxu0 0.0
  %792 = vmatprep.subr.mxu0 0.0
  %793 = vmatpush2.msra.mxu0 0.0
  %794 = vmatprep.subr.mxu0 0.0
  %795 = vmatpush2.msra.mxu0 0.0
  %796 = vmatprep.subr.mxu0 0.0
  %797 = vmatpush2.msra.mxu0 0.0
  %798 = vmatprep.subr.mxu0 0.0
  %799 = vmatpush2.msra.mxu0 0.0
  %800 = vmatprep.subr.mxu0 0.0
  %801 = vmatpush2.msra.mxu0 0.0
  %802 = vmatprep.subr.mxu0 0.0
  %803 = vmatpush2.msra.mxu0 0.0
  %804 = vmatprep.subr.mxu0 0.0
  %805 = vmatpush2.msra.mxu0 0.0
  %806 = vmatprep.subr.mxu0 0.0
  %807 = vmatpush2.msra.mxu0 0.0
  %808 = vmatprep.subr.mxu0 0.0
  %809 = vmatpush2.msra.mxu0 0.0
  %810 = vmatprep.subr.mxu0 0.0
  %811 = vmatpush2.msra.mxu0 0.0
  %812 = vmatprep.mubr.f32.mxu0 0.0
  %813 = vmatmul.mubr.f32.gmra.mxu0 %v729
  %v814 = vpop.f32.mrf.mxu0
  %v815 = vadd.f32 0.0, %v814
  %v816 = vpop.f32.mrf.mxu0
  %817 = vdwg.mxu0
  %s818 = scalar_lea.vmem [#allocation3], 48
  %v819 = vld [vmem:[%s818] sm:$0xff]
  %v820 = vadd.f32 %v819, %v815
  %v821 = vtanh.pop %v820
  %s822 = scalar_lea.vmem %s5, 48
  %823 = vst [vmem:[%s822] sm:$0xff] %v821
  %v824 = vld [vmem:[%s3] sm:$0xff]
  %v825 = vld [vmem:[%s3 + $0x8] sm:$0xff]
  %v826 = vld [vmem:[%s3 + $0x10] sm:$0xff]
  %v827 = vld [vmem:[%s3 + $0x18] sm:$0xff]
  %v828 = vld [vmem:[%s3 + $0x20] sm:$0xff]
  %v829 = vld [vmem:[%s3 + $0x28] sm:$0xff]
  %v830 = vld [vmem:[%s3 + $0x30] sm:$0xff]
  %v831 = vld [vmem:[%s3 + $0x38] sm:$0xff]
  %v832 = vld [vmem:[%s3 + $0x40] sm:$0xff]
  %v833 = vld [vmem:[%s3 + $0x48] sm:$0xff]
  %v834 = vld [vmem:[%s3 + $0x50] sm:$0xff]
  %v835 = vld [vmem:[%s3 + $0x58] sm:$0xff]
  %v836 = vld [vmem:[%s3 + $0x60] sm:$0xff]
  %v837 = vld [vmem:[%s3 + $0x68] sm:$0xff]
  %v838 = vld [vmem:[%s3 + $0x70] sm:$0xff]
  %v839 = vld [vmem:[%s3 + $0x78] sm:$0xff]
  %840 = vmatprep.subr.mxu0 0.0
  %841 = vmatpush1.msra.mxu0 %v839
  %842 = vmatprep.subr.mxu0 0.0
  %843 = vmatpush1.msra.mxu0 %v838
  %844 = vmatprep.subr.mxu0 0.0
  %845 = vmatpush1.msra.mxu0 %v837
  %846 = vmatprep.subr.mxu0 0.0
  %847 = vmatpush1.msra.mxu0 %v836
  %848 = vmatprep.subr.mxu0 0.0
  %849 = vmatpush1.msra.mxu0 %v835
  %850 = vmatprep.subr.mxu0 0.0
  %851 = vmatpush1.msra.mxu0 %v834
  %852 = vmatprep.subr.mxu0 0.0
  %853 = vmatpush1.msra.mxu0 %v833
  %854 = vmatprep.subr.mxu0 0.0
  %855 = vmatpush1.msra.mxu0 %v832
  %856 = vmatprep.subr.mxu0 0.0
  %857 = vmatpush1.msra.mxu0 %v831
  %858 = vmatprep.subr.mxu0 0.0
  %859 = vmatpush1.msra.mxu0 %v830
  %860 = vmatprep.subr.mxu0 0.0
  %861 = vmatpush1.msra.mxu0 %v829
  %862 = vmatprep.subr.mxu0 0.0
  %863 = vmatpush1.msra.mxu0 %v828
  %864 = vmatprep.subr.mxu0 0.0
  %865 = vmatpush1.msra.mxu0 %v827
  %866 = vmatprep.subr.mxu0 0.0
  %867 = vmatpush1.msra.mxu0 %v826
  %868 = vmatprep.subr.mxu0 0.0
  %869 = vmatpush1.msra.mxu0 %v825
  %870 = vmatprep.subr.mxu0 0.0
  %871 = vmatpush1.msra.mxu0 %v824
  %872 = vmatprep.subr.mxu0 0.0
  %873 = vmatpush2.msra.mxu0 0.0
  %874 = vmatprep.subr.mxu0 0.0
  %875 = vmatpush2.msra.mxu0 0.0
  %876 = vmatprep.subr.mxu0 0.0
  %877 = vmatpush2.msra.mxu0 0.0
  %878 = vmatprep.subr.mxu0 0.0
  %879 = vmatpush2.msra.mxu0 0.0
  %880 = vmatprep.subr.mxu0 0.0
  %881 = vmatpush2.msra.mxu0 0.0
  %882 = vmatprep.subr.mxu0 0.0
  %883 = vmatpush2.msra.mxu0 0.0
  %884 = vmatprep.subr.mxu0 0.0
  %885 = vmatpush2.msra.mxu0 0.0
  %886 = vmatprep.subr.mxu0 0.0
  %887 = vmatpush2.msra.mxu0 0.0
  %888 = vmatprep.subr.mxu0 0.0
  %889 = vmatpush2.msra.mxu0 0.0
  %890 = vmatprep.subr.mxu0 0.0
  %891 = vmatpush2.msra.mxu0 0.0
  %892 = vmatprep.subr.mxu0 0.0
  %893 = vmatpush2.msra.mxu0 0.0
  %894 = vmatprep.subr.mxu0 0.0
  %895 = vmatpush2.msra.mxu0 0.0
  %896 = vmatprep.subr.mxu0 0.0
  %897 = vmatpush2.msra.mxu0 0.0
  %898 = vmatprep.subr.mxu0 0.0
  %899 = vmatpush2.msra.mxu0 0.0
  %900 = vmatprep.subr.mxu0 0.0
  %901 = vmatpush2.msra.mxu0 0.0
  %902 = vmatprep.subr.mxu0 0.0
  %903 = vmatpush2.msra.mxu0 0.0
  %904 = vmatprep.mubr.f32.mxu0 0.0
  %905 = vmatmul.mubr.f32.gmra.mxu0 %v821
  %v906 = vpop.f32.mrf.mxu0
  %v907 = vadd.f32 0.0, %v906
  %v908 = vpop.f32.mrf.mxu0
  %909 = vdwg.mxu0
  %s910 = scalar_lea.vmem [#allocation3], 56
  %v911 = vld [vmem:[%s910] sm:$0xff]
  %v912 = vadd.f32 %v911, %v907
  %v913 = vtanh.pop %v912
  %s914 = scalar_lea.vmem %s5, 56
  %915 = vst [vmem:[%s914] sm:$0xff] %v913
  %916 = vst [vmem:[#allocation2] sm:$0xff] %v913
  // Predicated region
  $region26: #{elman_rnn_forward.1} parent=0 // pred_check
    _
  $region27: #{elman_rnn_forward.1} parent=0 // pred_check_branch
    %918 = sbr.rel (0) target = $region29
  $region28: #{elman_rnn_forward.1} parent=0 // pred_region
    _
  $region29: #{elman_rnn_forward.1} parent=0 // pred_fallthru
    _
  // Predicated region
  $region30: #{elman_rnn_forward.1} parent=0 // pred_check
    _
  $region31: #{elman_rnn_forward.1} parent=0 // pred_check_branch
    %920 = sbr.rel (0) target = $region33
  $region32: #{elman_rnn_forward.1} parent=0 // pred_region
    _
  $region33: #{elman_rnn_forward.1} parent=0 // pred_fallthru
    _

</llo_original>
